<compile_context>
chip_gen: v7x
topology: tpu7x:2x2x1
jax: 0.10.0
libtpu: 0.0.40
codegen_flags: <defaults>
</compile_context>

<pallas_src>
import functools

import jax
import jax.numpy as jnp
from jax.experimental import pallas as pl
from jax.experimental.pallas import tpu as pltpu

_EPS = 1e-8
_LANE = 128
_VMEM_LIMIT = 48 * 1024 * 1024   # raise scoped VMEM (v5e default 16 MiB); < v7x 64 MiB phys
_IO_BUDGET = 12 * 1024 * 1024    # budget for 2x double-buffered in + out blocks (+ f32 temps)
_MAX_TILE_ROWS = 1024            # diminishing returns past ~512-1024 rows (mem-bound)


def _sublane(dtype_bytes):
    # native sublane packing: 8 rows f32, 16 rows bf16, 32 rows int8/fp8
    return 8 * max(1, 4 // dtype_bytes)


def _choose_tile_rows(rows, lane, dtype_bytes):
    sub = _sublane(dtype_bytes)
    # in + out, double-buffered (4 copies) + ~2 f32-wide temporaries per row
    per_row = lane * (4 * dtype_bytes + 2 * 4)
    t = _IO_BUDGET // max(per_row, 1)
    t = min(int(t), _MAX_TILE_ROWS)
    if t >= rows:
        return rows                       # single full-extent block (always legal)
    t = max(sub, (t // sub) * sub)        # keep sublane-aligned block shape
    return t
    # TODO(synk): for extremely wide C where even `sub` rows overflow VMEM,
    # block the feature axis as a trailing "arbitrary" grid dim with a
    # (tile_rows, 1) f32 sum-of-squares scratch accumulator.


def _pixel_norm_kernel(x_ref, o_ref):
    # One (tile_rows, C) block; reduce the full feature axis (dim=1) per row.
    x = x_ref[...]
    xf = x.astype(jnp.float32)
    ss = jnp.sum(xf * xf, axis=1, keepdims=True)             # f32 accumulate
    inv = jax.lax.rsqrt(ss * (1.0 / x.shape[1]) + _EPS)      # EUP rsqrt, 1/C folded in
    # final scale in the input dtype (keeps bf16 store path in bf16)
    o_ref[...] = (x * inv.astype(x.dtype)).astype(o_ref.dtype)


def _pixel_norm_packed_kernel(x_ref, o_ref, *, c, k):
    # x_ref: (tile_rows, k*c). Each lane-row packs k original rows of width c;
    # every c-wide lane segment is normalized independently. Keeps the stored
    # block lane-dense (multiple of 128 lanes -> unmasked full-lane stores).
    x = x_ref[...]
    xf = x.astype(jnp.float32)
    segs = []
    for j in range(k):                    # k is a small static Python int
        sl = slice(j * c, (j + 1) * c)
        seg_f = xf[:, sl]
        ss = jnp.sum(seg_f * seg_f, axis=1, keepdims=True)
        inv = jax.lax.rsqrt(ss * (1.0 / c) + _EPS)
        segs.append(x[:, sl] * inv.astype(x.dtype))
    o_ref[...] = jnp.concatenate(segs, axis=1).astype(o_ref.dtype)


def pixel_norm(x, *, tile_rows=None):
    assert x.ndim == 2, "PixelNorm expects a 2-D input"
    n, c = x.shape
    dtype_bytes = jnp.dtype(x.dtype).itemsize

    # Lane-dense repack for small feature dims: fold k rows into one 128-wide
    # lane row (the reshape is a free view in the wrapper — no extra HBM pass).
    k = _LANE // c if (c < _LANE and _LANE % c == 0) else 1
    packed = (k > 1) and (n % k == 0)

    if packed:
        xw = x.reshape(n // k, k * c)
        kernel = functools.partial(_pixel_norm_packed_kernel, c=c, k=k)
    else:
        xw = x
        kernel = _pixel_norm_kernel

    rows, lane = xw.shape
    if tile_rows is None:
        tile_rows = _choose_tile_rows(rows, lane, dtype_bytes)

    # No jnp.pad: the trailing partial block is masked by Pallas; the padded
    # tail rows are garbage but row-wise independent and never written back.
    grid = (pl.cdiv(rows, tile_rows),)

    out = pl.pallas_call(
        kernel,
        out_shape=jax.ShapeDtypeStruct((rows, lane), x.dtype),
        grid_spec=pltpu.PrefetchScalarGridSpec(
            num_scalar_prefetch=0,
            grid=grid,
            in_specs=[pl.BlockSpec((tile_rows, lane), lambda i: (i, 0))],
            out_specs=pl.BlockSpec((tile_rows, lane), lambda i: (i, 0)),
        ),
        compiler_params=pltpu.CompilerParams(
            dimension_semantics=("parallel",),   # shards rows across v7x's 2 TCs
            vmem_limit_bytes=_VMEM_LIMIT,
        ),
    )(xw)

    return out.reshape(n, c) if packed else out


def pixel_norm_ref(x):
    x32 = x.astype(jnp.float32)
    return (x32 * jax.lax.rsqrt(jnp.mean(x32 * x32, axis=1, keepdims=True) + 1e-8)).astype(x.dtype)


if __name__ == "__main__":
    key = jax.random.PRNGKey(0)

    # Small shape consistent with the module: batch=8 rows, hidden=32 features
    # (exercises the lane-dense packed path: 4 rows folded into 128 lanes).
    x = jax.random.normal(key, (8, 32), dtype=jnp.float32)
    y = jax.block_until_ready(pixel_norm(x))
    y_ref = pixel_norm_ref(x)
    assert y.shape == x.shape and y.dtype == x.dtype
    assert jnp.allclose(y, y_ref, atol=1e-5, rtol=1e-5), "mismatch vs reference (packed path)"

    # General path: wide features, row count not a multiple of 8 (partial block, no pad).
    x2 = jax.random.normal(jax.random.PRNGKey(1), (10, 256), dtype=jnp.float32)
    y2 = jax.block_until_ready(pixel_norm(x2))
    assert jnp.allclose(y2, pixel_norm_ref(x2), atol=1e-5, rtol=1e-5), "mismatch vs reference (general path)"

    print("KERNEL_OK")
</pallas_src>

<mosaic_0001>
module attributes {stable_mosaic.version = 11 : i64} {
  func.func @_pixel_norm_packed_kernel(%arg0: i32, %arg1: memref<2x128xf32, #tpu.memory_space<vmem>>, %arg2: memref<2x128xf32, #tpu.memory_space<vmem>>) attributes {dimension_semantics = [#tpu.dimension_semantics<parallel>], iteration_bounds = array<i64: 1>, scalar_prefetch = 0 : i64, scratch_operands = 0 : i64, tpu.core_type = #tpu.core_type<tc>, window_params = [{transform_indices = @transform_0, window_bounds = array<i64: 2, 128>}, {transform_indices = @transform_1, window_bounds = array<i64: 2, 128>}]} {
    %c0 = arith.constant 0 : index
    %c0_0 = arith.constant 0 : index
    %0 = vector.load %arg1[%c0, %c0_0] : memref<2x128xf32, #tpu.memory_space<vmem>>, vector<2x128xf32>
    %1 = vector.extract_strided_slice %0 {offsets = [0, 0], sizes = [2, 32], strides = [1, 1]} : vector<2x128xf32> to vector<2x32xf32>
    %2 = arith.mulf %1, %1 : vector<2x32xf32>
    %cst = arith.constant dense<0.000000e+00> : vector<2xf32>
    %3 = vector.multi_reduction <add>, %2, %cst [1] : vector<2x32xf32> to vector<2xf32>
    %4 = vector.shape_cast %3 : vector<2xf32> to vector<2x1xf32>
    %cst_1 = arith.constant 3.125000e-02 : f32
    %5 = vector.broadcast %cst_1 : f32 to vector<2x1xf32>
    %6 = arith.mulf %4, %5 : vector<2x1xf32>
    %cst_2 = arith.constant 9.99999993E-9 : f32
    %7 = vector.broadcast %cst_2 : f32 to vector<2x1xf32>
    %8 = arith.addf %6, %7 : vector<2x1xf32>
    %9 = math.rsqrt %8 : vector<2x1xf32>
    %10 = vector.extract_strided_slice %0 {offsets = [0, 0], sizes = [2, 32], strides = [1, 1]} : vector<2x128xf32> to vector<2x32xf32>
    %11 = vector.broadcast %9 : vector<2x1xf32> to vector<2x32xf32>
    %12 = arith.mulf %10, %11 : vector<2x32xf32>
    %13 = vector.extract_strided_slice %0 {offsets = [0, 32], sizes = [2, 32], strides = [1, 1]} : vector<2x128xf32> to vector<2x32xf32>
    %14 = arith.mulf %13, %13 : vector<2x32xf32>
    %cst_3 = arith.constant dense<0.000000e+00> : vector<2xf32>
    %15 = vector.multi_reduction <add>, %14, %cst_3 [1] : vector<2x32xf32> to vector<2xf32>
    %16 = vector.shape_cast %15 : vector<2xf32> to vector<2x1xf32>
    %cst_4 = arith.constant 3.125000e-02 : f32
    %17 = vector.broadcast %cst_4 : f32 to vector<2x1xf32>
    %18 = arith.mulf %16, %17 : vector<2x1xf32>
    %cst_5 = arith.constant 9.99999993E-9 : f32
    %19 = vector.broadcast %cst_5 : f32 to vector<2x1xf32>
    %20 = arith.addf %18, %19 : vector<2x1xf32>
    %21 = math.rsqrt %20 : vector<2x1xf32>
    %22 = vector.extract_strided_slice %0 {offsets = [0, 32], sizes = [2, 32], strides = [1, 1]} : vector<2x128xf32> to vector<2x32xf32>
    %23 = vector.broadcast %21 : vector<2x1xf32> to vector<2x32xf32>
    %24 = arith.mulf %22, %23 : vector<2x32xf32>
    %25 = vector.extract_strided_slice %0 {offsets = [0, 64], sizes = [2, 32], strides = [1, 1]} : vector<2x128xf32> to vector<2x32xf32>
    %26 = arith.mulf %25, %25 : vector<2x32xf32>
    %cst_6 = arith.constant dense<0.000000e+00> : vector<2xf32>
    %27 = vector.multi_reduction <add>, %26, %cst_6 [1] : vector<2x32xf32> to vector<2xf32>
    %28 = vector.shape_cast %27 : vector<2xf32> to vector<2x1xf32>
    %cst_7 = arith.constant 3.125000e-02 : f32
    %29 = vector.broadcast %cst_7 : f32 to vector<2x1xf32>
    %30 = arith.mulf %28, %29 : vector<2x1xf32>
    %cst_8 = arith.constant 9.99999993E-9 : f32
    %31 = vector.broadcast %cst_8 : f32 to vector<2x1xf32>
    %32 = arith.addf %30, %31 : vector<2x1xf32>
    %33 = math.rsqrt %32 : vector<2x1xf32>
    %34 = vector.extract_strided_slice %0 {offsets = [0, 64], sizes = [2, 32], strides = [1, 1]} : vector<2x128xf32> to vector<2x32xf32>
    %35 = vector.broadcast %33 : vector<2x1xf32> to vector<2x32xf32>
    %36 = arith.mulf %34, %35 : vector<2x32xf32>
    %37 = vector.extract_strided_slice %0 {offsets = [0, 96], sizes = [2, 32], strides = [1, 1]} : vector<2x128xf32> to vector<2x32xf32>
    %38 = arith.mulf %37, %37 : vector<2x32xf32>
    %cst_9 = arith.constant dense<0.000000e+00> : vector<2xf32>
    %39 = vector.multi_reduction <add>, %38, %cst_9 [1] : vector<2x32xf32> to vector<2xf32>
    %40 = vector.shape_cast %39 : vector<2xf32> to vector<2x1xf32>
    %cst_10 = arith.constant 3.125000e-02 : f32
    %41 = vector.broadcast %cst_10 : f32 to vector<2x1xf32>
    %42 = arith.mulf %40, %41 : vector<2x1xf32>
    %cst_11 = arith.constant 9.99999993E-9 : f32
    %43 = vector.broadcast %cst_11 : f32 to vector<2x1xf32>
    %44 = arith.addf %42, %43 : vector<2x1xf32>
    %45 = math.rsqrt %44 : vector<2x1xf32>
    %46 = vector.extract_strided_slice %0 {offsets = [0, 96], sizes = [2, 32], strides = [1, 1]} : vector<2x128xf32> to vector<2x32xf32>
    %47 = vector.broadcast %45 : vector<2x1xf32> to vector<2x32xf32>
    %48 = arith.mulf %46, %47 : vector<2x32xf32>
    %49 = tpu.concatenate %12, %24, %36, %48 in 1 : vector<2x32xf32>, vector<2x32xf32>, vector<2x32xf32>, vector<2x32xf32> -> vector<2x128xf32>
    %c0_12 = arith.constant 0 : index
    %c0_13 = arith.constant 0 : index
    %50 = vector.load %arg2[%c0_12, %c0_13] : memref<2x128xf32, #tpu.memory_space<vmem>>, vector<2x128xf32>
    tpu.vector_store %arg2[%c0_12, %c0_13], %49 {strides = array<i32>} : memref<2x128xf32, #tpu.memory_space<vmem>>, vector<2x128xf32>,
    return
  }
  func.func @transform_0(%arg0: i32) -> (i32, i32) {
    %c0_i32 = arith.constant 0 : i32
    %c0_i32_0 = arith.constant 0 : i32
    return %arg0, %c0_i32 : i32, i32
  }
  func.func @transform_1(%arg0: i32) -> (i32, i32) {
    %c0_i32 = arith.constant 0 : i32
    %c0_i32_0 = arith.constant 0 : i32
    return %arg0, %c0_i32 : i32, i32
  }
}

</mosaic_0001>

<llo_original>
// kernel: tpu_custom_call.1
$region0: #{tpu_custom_call.1}
  #allocation0 [shape = 'u32[]', space=smem, size = 0x4, offset = 0x4, fixed_abs, tag = 'smem constant byte address 0x4 - core index']
  #allocation1 [shape = 'u32[144,128]{1,0:T(1,128)}', space=vmem, size = 0x12000, scoped, tag = 'internal scratch']
  %s0 = inlined_call_operand.hbm [shape: f32[2,128], index: 0, kind: input, shape index: {}]
  %s1 = inlined_call_operand.hbm [shape: f32[2,128], index: 1, kind: output, shape index: {}]
  %s2 = sld [smem:[#allocation0]]
  $region18: #{tpu_custom_call.1} parent=0
    _
  %s4 = ssub.s32 1, %s2
  %s5 = scalar_select 0, %s4, %s2
  $region1: #{tpu_custom_call.1} parent=0
    #allocation2 [shape = 'u8[1024]{0}', space=vmem, size = 0x400, scoped, tag = 'input window, operand 0, single buffered']
    #allocation3 [shape = 's32[1]{0}', space=sflag, size = 0x4, scoped, tag = 'scoped memory for tpu_custom_call.1']
    #allocation4 [shape = 's32[1]{0}', space=sflag, size = 0x4, scoped, tag = 'scoped memory for tpu_custom_call.1']
    #allocation5 [shape = 'u8[1024]{0}', space=vmem, size = 0x400, scoped, tag = 'output window, operand 0, single buffered']
    %6 = vsyncpa [#allocation3], 0
    %7 = vsyncpa [#allocation4], 0
    // Predicated region
    $region2: #{tpu_custom_call.1} parent=1 // pred_check
      _
    $region3: #{tpu_custom_call.1} parent=1 // pred_check_branch
      %9 = sbr.rel (0) target = $region5
    $region4: #{tpu_custom_call.1} parent=1 // pred_region
      %s11 = ssub.s32 32, 32
      %12 = vsyncadd [#allocation3], %s11
      %s14 = sshll.u32 [#allocation2], 4
      %s15 = int_to_ptr.vmem [resolvable:$true] %s14
      %17 = dma.hbm_to_vmem [thread:$0]  %s0, 32, %s15, [#allocation3]
    $region5: #{tpu_custom_call.1} parent=1 // pred_fallthru
      _
    // Predicated region
    $region6: #{tpu_custom_call.1} parent=1 // pred_check
      _
    $region7: #{tpu_custom_call.1} parent=1 // pred_check_branch
      %19 = sbr.rel (0) target = $region9
    $region8: #{tpu_custom_call.1} parent=1 // pred_region
      %20 = dma.done [#allocation3], 32
    $region9: #{tpu_custom_call.1} parent=1 // pred_fallthru
      _
    %v21 = vld [vmem:[#allocation2] sm:$0x3]
    %v22 = vmul.f32 %v21, %v21
    %vm23 = vcmask 254976
    %v24 = vsel %vm23, %v22, 0.0
    %25 = vadd.xlane.f32.xlu0 %v24
    %v26 = vpop.xlane.xlu0 %25
    %v27 = vmul.f32 %v26, 0.03125
    %v28 = vadd.f32 %v27, 1e-08
    %v29 = vrsqrt.pop %v28
    %v30 = vmul.f32 %v21, %v29
    %32 = vrot.lane.b32.xlu0 %v22, 96
    %v33 = vpop.permute.xlu0 %32
    %v35 = vsel %vm23, %v33, 0.0
    %36 = vadd.xlane.f32.xlu0 %v35
    %v37 = vpop.xlane.xlu0 %36
    %v38 = vmul.f32 %v37, 0.03125
    %v39 = vadd.f32 %v38, 1e-08
    %v40 = vrsqrt.pop %v39
    %v41 = vmul.f32 %v21, %v40
    %42 = vrot.lane.b32.xlu0 %v22, 64
    %v43 = vpop.permute.xlu0 %42
    %v45 = vsel %vm23, %v43, 0.0
    %46 = vadd.xlane.f32.xlu0 %v45
    %v47 = vpop.xlane.xlu0 %46
    %v48 = vmul.f32 %v47, 0.03125
    %v49 = vadd.f32 %v48, 1e-08
    %v50 = vrsqrt.pop %v49
    %v51 = vmul.f32 %v21, %v50
    %52 = vrot.lane.b32.xlu0 %v22, 32
    %v53 = vpop.permute.xlu0 %52
    %v55 = vsel %vm23, %v53, 0.0
    %56 = vadd.xlane.f32.xlu0 %v55
    %v57 = vpop.xlane.xlu0 %56
    %v58 = vmul.f32 %v57, 0.03125
    %v59 = vadd.f32 %v58, 1e-08
    %v60 = vrsqrt.pop %v59
    %v61 = vmul.f32 %v21, %v60
    %vm62 = vcmask 261120
    %v63 = vsel %vm62, %v30, %v41
    %vm64 = vcmask 523264
    %v65 = vsel %vm64, %v63, %v51
    %vm66 = vcmask 785408
    %v67 = vsel %vm66, %v65, %v61
    %68 = vst [vmem:[#allocation5] sm:$0x3] %v67
    // Predicated region
    $region10: #{tpu_custom_call.1} parent=1 // pred_check
      _
    $region11: #{tpu_custom_call.1} parent=1 // pred_check_branch
      %70 = sbr.rel (0) target = $region13
    $region12: #{tpu_custom_call.1} parent=1 // pred_region
      %s72 = ssub.s32 32, 32
      %73 = vsyncadd [#allocation4], %s72
      %s75 = sshll.u32 [#allocation5], 4
      %s76 = int_to_ptr.vmem [resolvable:$true] %s75
      %78 = dma.vmem_to_hbm [thread:$0]  %s76, 32, %s1, [#allocation4]
    $region13: #{tpu_custom_call.1} parent=1 // pred_fallthru
      _
    // Predicated region
    $region14: #{tpu_custom_call.1} parent=1 // pred_check
      _
    $region15: #{tpu_custom_call.1} parent=1 // pred_check_branch
      %80 = sbr.rel (0) target = $region17
    $region16: #{tpu_custom_call.1} parent=1 // pred_region
      %81 = dma.done [#allocation4], 32
    $region17: #{tpu_custom_call.1} parent=1 // pred_fallthru
      _
    %82 = vsyncpa [#allocation3], 1
    %83 = vsyncpa [#allocation4], 1

</llo_original>
